<compile_context>
chip_gen: v5e
topology: v5e:2x2
jax: 0.10.0
libtpu: 0.0.40
codegen_flags: <defaults>
</compile_context>

<pallas_src>
import jax
import jax.numpy as jnp
from jax import lax
from jax.experimental import pallas as pl
from jax.experimental.pallas import tpu as pltpu


# --------------------------------------------------------------------------
# Kernel
# --------------------------------------------------------------------------
def net_fwd_kernel(a_ref, root_ref, noise_ref, st_ref,
                   xw1_ref, b1_ref, w34a_ref, w34b_ref, b34_ref,
                   wfc_ref, bfc_ref,
                   out_ref,
                   mls_s, pooled_s):
    phase = pl.program_id(0)
    i = pl.program_id(1)
    tm = a_ref.shape[0]
    out_feats = noise_ref.shape[1]

    # ---- phase 0: single streaming pass over (symmetric) A_hat -------------
    @pl.when(phase == 0)
    def _a_pass():
        @pl.when(i == 0)
        def _init():
            mls_s[...] = jnp.zeros_like(mls_s)

        # layer 1: H1[tile] = relu(A[tile,:] @ XW1 + b1)   (Dropout p=0 = id)
        h1 = jnp.dot(a_ref[...], xw1_ref[...],
                     preferred_element_type=jnp.float32) + b1_ref[...]
        h1 = jnp.maximum(h1, 0.0)
        root = jnp.maximum(root_ref[...], 0.0)         # ReLU applied post-concat
        xw34 = (jnp.dot(h1, w34a_ref[...], preferred_element_type=jnp.float32)
                + jnp.dot(root, w34b_ref[...], preferred_element_type=jnp.float32))
        # layer 2 accumulation reusing the resident A tile (A symmetric:
        # A[:, tile] == A[tile, :]^T):   mls += A[tile,:]^T @ XW34[tile]
        # bf16 operand matches the bf16 A tile (f32 MXU accumulation); the
        # log_std rounding this implies is verified against the f32 reference.
        mls_s[...] += lax.dot_general(
            a_ref[...], xw34.astype(a_ref.dtype),
            dimension_numbers=(((0,), (0,)), ((), ())),
            preferred_element_type=jnp.float32)

    # ---- phase 1: A-free finalize: reparametrize, mean-pool, FC head -------
    @pl.when(phase == 1)
    def _finalize():
        @pl.when(i == 0)
        def _init():
            pooled_s[...] = jnp.zeros_like(pooled_s)

        row0 = pl.multiple_of(i * tm, tm)              # tile-aligned scratch read
        mls = mls_s[pl.ds(row0, tm), :] + b34_ref[...]
        mean = mls[:, :out_feats]
        log_std = mls[:, out_feats:]
        z = mean + noise_ref[...] * jnp.exp(log_std)   # reparametrize (training)
        # NOTE: padded node rows carry bias-only garbage in z; this is exactly
        # neutralized because the padded rows of S^T are zero (see wrapper).
        pooled_s[...] += lax.dot_general(
            st_ref[...], z, dimension_numbers=(((0,), (0,)), ((), ())),
            preferred_element_type=jnp.float32)

        @pl.when(i == pl.num_programs(1) - 1)
        def _head():
            logits = jnp.dot(pooled_s[...], wfc_ref[...],
                             preferred_element_type=jnp.float32) + bfc_ref[...]
            m = jnp.max(logits, axis=-1, keepdims=True)
            lse = m + jnp.log(jnp.sum(jnp.exp(logits - m), axis=-1, keepdims=True))
            out_ref[...] = logits - lse


# --------------------------------------------------------------------------
# VMEM budgeting helpers (lane/sublane-padding aware)
# --------------------------------------------------------------------------
def _round_up(v, m):
    return -(-v // m) * m


def _padded_bytes(rows, cols, itemsize):
    sub = 32 // itemsize          # sublane tile: 8 for f32, 16 for bf16
    return _round_up(rows, sub) * _round_up(cols, 128) * itemsize


def _vmem_capacity_bytes():
    try:
        info = pltpu.get_tpu_info()
        return int(getattr(info, "vmem_capacity_bytes", 64 * 2 ** 20))
    except Exception:
        return 64 * 2 ** 20       # conservative (v7x per-core) fallback


def _kernel_vmem_bytes(tm, n_pad, f_in, hid, out_feats, b_pad, n_classes):
    # double-buffered streamed tiles + output block
    stream = 2 * (_padded_bytes(tm, n_pad, 2)            # A_hat tile (bf16)
                  + _padded_bytes(tm, f_in, 4)           # root tile
                  + _padded_bytes(tm, out_feats, 4)      # noise tile
                  + _padded_bytes(tm, b_pad, 4)          # S^T tile
                  + _padded_bytes(b_pad, n_classes, 4))  # output block
    # residents
    resident = (_padded_bytes(n_pad, hid, 2)             # XW1 (bf16 VMEM input)
                + _padded_bytes(n_pad, 2 * out_feats, 4)  # mls accumulator
                + _padded_bytes(b_pad, out_feats, 4)      # pooled accumulator
                + _padded_bytes(1, hid, 4)                # b1
                + _padded_bytes(hid, 2 * out_feats, 4)    # W34a
                + _padded_bytes(f_in, 2 * out_feats, 4)   # W34b
                + _padded_bytes(1, 2 * out_feats, 4)      # b34
                + _padded_bytes(out_feats, n_classes, 4)  # Wfc
                + _padded_bytes(1, n_classes, 4))         # bfc
    return stream + resident


# --------------------------------------------------------------------------
# Wrapper
# --------------------------------------------------------------------------
def net_forward(a_hat, x, root_extend, s_mean, noise, params, *, tm=None):
    n, f_in = x.shape
    b = s_mean.shape[0]
    w1, b1, w3, b3, w4, b4, wfc, bfc = params
    hid = w1.shape[1]
    out_feats = w3.shape[1]
    n_classes = wfc.shape[1]
    b_pad = _round_up(b, 8)

    vmem_cap = _vmem_capacity_bytes()
    budget = int(0.85 * vmem_cap)             # headroom under physical VMEM

    # row tile over nodes: largest tile whose footprint fits the budget
    if tm is None:
        tm = 16
        for cand in (512, 256, 128, 64, 32, 16):
            n_pad_c = _round_up(max(n, cand), cand)
            if _kernel_vmem_bytes(cand, n_pad_c, f_in, hid, out_feats,
                                  b_pad, n_classes) <= int(0.7 * budget):
                tm = cand
                break
        tm = min(tm, _round_up(max(n, 16), 16))   # don't over-pad tiny graphs
    tm = max(16, (tm // 16) * 16)

    n_pad = _round_up(max(n, tm), tm)
    n_tiles = n_pad // tm

    pad2 = lambda a, r, c: jnp.pad(a, ((0, r - a.shape[0]), (0, c - a.shape[1])))

    # A_hat must be symmetric (undirected edges + symmetric GCN normalization):
    # the single-pass kernel relies on A[:, tile] == A[tile, :]^T.
    a_p = pad2(a_hat.astype(jnp.float32), n_pad, n_pad).astype(jnp.bfloat16)
    root_p = pad2(root_extend, n_pad, f_in)
    noise_p = pad2(noise, n_pad, out_feats)
    st_p = pad2(s_mean.T, n_pad, b_pad)          # (N_pad, B_pad); padded rows == 0

    # XW1 = X @ W1 hoisted out of the Pallas grid (O(N*hid) bytes, negligible
    # vs the N^2 A stream); fed as a resident bf16 VMEM input.
    xw1 = jnp.dot(pad2(x, n_pad, f_in), w1,
                  preferred_element_type=jnp.float32).astype(jnp.bfloat16)

    # fuse conv3/conv4 column-wise so mean/log_std share ONE A_hat contraction
    w34a = jnp.concatenate([w3[:hid], w4[:hid]], axis=1)      # (hid,  2*out)
    w34b = jnp.concatenate([w3[hid:], w4[hid:]], axis=1)      # (f_in, 2*out)
    b34 = jnp.concatenate([b3, b4]).reshape(1, -1)            # (1,    2*out)

    grid = (2, n_tiles)
    last = n_tiles - 1

    # phase-gated streaming: a constant block index outside the consuming phase
    # means the block is NOT re-fetched there (A is streamed exactly once).
    a_map = lambda p, i: (jnp.where(p == 0, i, last), 0)
    root_map = lambda p, i: (jnp.where(p == 0, i, last), 0)
    fin_map = lambda p, i: (jnp.where(p == 0, 0, i), 0)

    in_specs = [
        pl.BlockSpec((tm, n_pad), a_map),            # A_hat row tile (single pass)
        pl.BlockSpec((tm, f_in), root_map),          # root_extend
        pl.BlockSpec((tm, out_feats), fin_map),      # reparametrization noise
        pl.BlockSpec((tm, b_pad), fin_map),          # S^T (pooling, transposed)
    ] + [pl.BlockSpec(memory_space=pltpu.MemorySpace.VMEM)] * 7  # XW1 + weights

    out_spec = pl.BlockSpec((b_pad, n_classes), lambda p, i: (0, 0))

    scratch_shapes = [
        pltpu.VMEM((n_pad, 2 * out_feats), jnp.float32),   # mls = [mean|log_std]
        pltpu.VMEM((b_pad, out_feats), jnp.float32),       # pooled accumulator
    ]

    need = _kernel_vmem_bytes(tm, n_pad, f_in, hid, out_feats, b_pad, n_classes)
    vmem_bytes = int(min(budget, max(int(1.3 * need), 16 * 2 ** 20)))

    cost = pl.CostEstimate(
        flops=int(2 * n_pad * n_pad * (hid + 2 * out_feats)
                  + 2 * n_pad * (hid + f_in) * 2 * out_feats
                  + 2 * n_pad * b_pad * out_feats
                  + 2 * b_pad * out_feats * n_classes),
        transcendentals=int(n_pad * out_feats + 2 * b_pad * n_classes),
        bytes_accessed=int(n_pad * n_pad * 2                       # A streamed ONCE
                           + n_pad * (f_in + out_feats + b_pad) * 4
                           + n_pad * hid * 2
                           + 4 * (hid + (hid + f_in + 1) * 2 * out_feats
                                  + (out_feats + 1) * n_classes)
                           + 4 * b_pad * n_classes),
    )

    out = pl.pallas_call(
        net_fwd_kernel,
        out_shape=jax.ShapeDtypeStruct((b_pad, n_classes), jnp.float32),
        grid_spec=pltpu.PrefetchScalarGridSpec(
            num_scalar_prefetch=0,
            grid=grid,
            in_specs=in_specs,
            out_specs=out_spec,
            scratch_shapes=scratch_shapes,
        ),
        compiler_params=pltpu.CompilerParams(
            # both axes sequential: cross-phase mls resident + pooled accumulator
            dimension_semantics=("arbitrary", "arbitrary"),
            vmem_limit_bytes=vmem_bytes,
        ),
        cost_estimate=cost,
    )(a_p, root_p, noise_p, st_p,
      xw1, b1.reshape(1, -1), w34a, w34b, b34, wfc, bfc.reshape(1, -1))
    return out[:b]


# --------------------------------------------------------------------------
# JAX glue: graph densification + params + pure-JAX reference
# --------------------------------------------------------------------------
def build_graph_tensors(x, edge_index, batch, rootindex, n_graphs):
    """Densify graph structure (GCN normalization, root broadcast, mean pool)."""
    n = x.shape[0]
    src, dst = edge_index[0], edge_index[1]
    adj = jnp.zeros((n, n), jnp.float32).at[dst, src].set(1.0)
    adj = jnp.maximum(adj, jnp.eye(n, dtype=jnp.float32))   # self-loops weight 1
    deg = adj.sum(axis=1)
    dinv = 1.0 / jnp.sqrt(deg)
    a_hat = dinv[:, None] * adj * dinv[None, :]              # symmetric
    root_extend = x[rootindex[batch]]                        # x of each node's root
    onehot = (batch[None, :] == jnp.arange(n_graphs)[:, None]).astype(jnp.float32)
    s_mean = onehot / onehot.sum(axis=1, keepdims=True)      # scatter_mean (B, N)
    return a_hat, root_extend, s_mean


def init_params(key, in_feats, hid_feats, out_feats):
    ks = jax.random.split(key, 8)
    scale = 0.1
    w1 = scale * jax.random.normal(ks[0], (in_feats, hid_feats), jnp.float32)
    b1 = scale * jax.random.normal(ks[1], (hid_feats,), jnp.float32)
    w3 = scale * jax.random.normal(ks[2], (hid_feats + in_feats, out_feats), jnp.float32)
    b3 = scale * jax.random.normal(ks[3], (out_feats,), jnp.float32)
    w4 = scale * jax.random.normal(ks[4], (hid_feats + in_feats, out_feats), jnp.float32)
    b4 = scale * jax.random.normal(ks[5], (out_feats,), jnp.float32)
    wfc = scale * jax.random.normal(ks[6], (out_feats, 4), jnp.float32)
    bfc = scale * jax.random.normal(ks[7], (4,), jnp.float32)
    return (w1, b1, w3, b3, w4, b4, wfc, bfc)


def net_forward_ref(a_hat, x, root_extend, s_mean, noise, params):
    """Pure-JAX f32 reference of the same forward pass (for verification)."""
    w1, b1, w3, b3, w4, b4, wfc, bfc = params
    h1 = jnp.maximum(a_hat @ (x @ w1) + b1, 0.0)
    xcat = jnp.concatenate([h1, jnp.maximum(root_extend, 0.0)], axis=1)
    mean = a_hat @ (xcat @ w3) + b3
    log_std = a_hat @ (xcat @ w4) + b4
    z = mean + noise * jnp.exp(log_std)
    pooled = s_mean @ z
    logits = pooled @ wfc + bfc
    return jax.nn.log_softmax(logits, axis=-1)


# --------------------------------------------------------------------------
# Demo
# --------------------------------------------------------------------------
if __name__ == "__main__":
    key = jax.random.PRNGKey(0)
    k_x, k_noise, k_p = jax.random.split(key, 3)

    in_feats, hid_feats, out_feats = 16, 32, 8
    nodes_per_graph, n_graphs = 10, 2
    n_nodes = nodes_per_graph * n_graphs

    x = jax.random.normal(k_x, (n_nodes, in_feats), jnp.float32)

    # two chain graphs (undirected edges), roots at node 0 of each graph
    src, dst, batch_list = [], [], []
    for g in range(n_graphs):
        base = g * nodes_per_graph
        for k in range(nodes_per_graph - 1):
            src += [base + k, base + k + 1]
            dst += [base + k + 1, base + k]
        batch_list += [g] * nodes_per_graph
    edge_index = jnp.array([src, dst], jnp.int32)
    batch = jnp.array(batch_list, jnp.int32)
    rootindex = jnp.array([g * nodes_per_graph for g in range(n_graphs)], jnp.int32)

    a_hat, root_extend, s_mean = build_graph_tensors(x, edge_index, batch,
                                                     rootindex, n_graphs)
    params = init_params(k_p, in_feats, hid_feats, out_feats)
    # reparametrization noise (torch.randn_like(log_std)), drawn in glue
    noise = jax.random.normal(k_noise, (n_nodes, out_feats), jnp.float32)

    # tm=16 -> N padded to 32, 2 row tiles: exercises the multi-tile grid +
    # the symmetry-based cross-tile mls accumulation path
    out = net_forward(a_hat, x, root_extend, s_mean, noise, params, tm=16)
    out = jax.block_until_ready(out)
    ref = net_forward_ref(a_hat, x, root_extend, s_mean, noise, params)

    assert out.shape == (n_graphs, 4)
    assert bool(jnp.all(jnp.isfinite(out)))
    assert bool(jnp.allclose(out, ref, atol=5e-2, rtol=5e-2))
    print("KERNEL_OK")
</pallas_src>

<mosaic_0001>
module attributes {stable_mosaic.version = 11 : i64} {
  func.func @net_fwd_kernel(%arg0: i32, %arg1: i32, %arg2: memref<16x32xbf16, #tpu.memory_space<vmem>>, %arg3: memref<16x16xf32, #tpu.memory_space<vmem>>, %arg4: memref<16x8xf32, #tpu.memory_space<vmem>>, %arg5: memref<16x8xf32, #tpu.memory_space<vmem>>, %arg6: memref<32x32xbf16, #tpu.memory_space<vmem>>, %arg7: memref<1x32xf32, #tpu.memory_space<vmem>>, %arg8: memref<32x16xf32, #tpu.memory_space<vmem>>, %arg9: memref<16x16xf32, #tpu.memory_space<vmem>>, %arg10: memref<1x16xf32, #tpu.memory_space<vmem>>, %arg11: memref<8x4xf32, #tpu.memory_space<vmem>>, %arg12: memref<1x4xf32, #tpu.memory_space<vmem>>, %arg13: memref<8x4xf32, #tpu.memory_space<vmem>>, %arg14: memref<32x16xf32, #tpu.memory_space<vmem>>, %arg15: memref<8x8xf32, #tpu.memory_space<vmem>>) attributes {dimension_semantics = [#tpu.dimension_semantics<arbitrary>, #tpu.dimension_semantics<arbitrary>], iteration_bounds = array<i64: 2, 2>, scalar_prefetch = 0 : i64, scratch_operands = 2 : i64, tpu.core_type = #tpu.core_type<tc>, window_params = [{transform_indices = @transform_0, window_bounds = array<i64: 16, 32>}, {transform_indices = @transform_1, window_bounds = array<i64: 16, 16>}, {transform_indices = @transform_2, window_bounds = array<i64: 16, 8>}, {transform_indices = @transform_3, window_bounds = array<i64: 16, 8>}, {pipeline_mode = #tpu.pipeline_mode<synchronous>, transform_indices = @transform_4, window_bounds = array<i64: 32, 32>}, {pipeline_mode = #tpu.pipeline_mode<synchronous>, transform_indices = @transform_5, window_bounds = array<i64: 1, 32>}, {pipeline_mode = #tpu.pipeline_mode<synchronous>, transform_indices = @transform_6, window_bounds = array<i64: 32, 16>}, {pipeline_mode = #tpu.pipeline_mode<synchronous>, transform_indices = @transform_7, window_bounds = array<i64: 16, 16>}, {pipeline_mode = #tpu.pipeline_mode<synchronous>, transform_indices = @transform_8, window_bounds = array<i64: 1, 16>}, {pipeline_mode = #tpu.pipeline_mode<synchronous>, transform_indices = @transform_9, window_bounds = array<i64: 8, 4>}, {pipeline_mode = #tpu.pipeline_mode<synchronous>, transform_indices = @transform_10, window_bounds = array<i64: 1, 4>}, {pipeline_mode = #tpu.pipeline_mode<synchronous>, transform_indices = @transform_11, window_bounds = array<i64: 8, 4>}]} {
    %c0_i32 = arith.constant 0 : i32
    %0 = arith.cmpi eq, %arg0, %c0_i32 : i32
    %1 = arith.extui %0 : i1 to i32
    %c0_i32_0 = arith.constant 0 : i32
    %2 = arith.cmpi ne, %1, %c0_i32_0 : i32
    scf.if %2 {
      %c0_i32_2 = arith.constant 0 : i32
      %6 = arith.cmpi eq, %arg1, %c0_i32_2 : i32
      %7 = arith.extui %6 : i1 to i32
      %c0_i32_3 = arith.constant 0 : i32
      %8 = arith.cmpi ne, %7, %c0_i32_3 : i32
      scf.if %8 {
        %cst_26 = arith.constant 0.000000e+00 : f32
        %31 = vector.broadcast %cst_26 : f32 to vector<32x16xf32>
        %c0_27 = arith.constant 0 : index
        %c0_28 = arith.constant 0 : index
        %32 = vector.load %arg14[%c0_27, %c0_28] : memref<32x16xf32, #tpu.memory_space<vmem>>, vector<32x16xf32>
        tpu.vector_store %arg14[%c0_27, %c0_28], %31 {strides = array<i32>} : memref<32x16xf32, #tpu.memory_space<vmem>>, vector<32x16xf32>,
      } else {
      }
      %c0 = arith.constant 0 : index
      %c0_4 = arith.constant 0 : index
      %9 = vector.load %arg2[%c0, %c0_4] : memref<16x32xbf16, #tpu.memory_space<vmem>>, vector<16x32xbf16>
      %c0_5 = arith.constant 0 : index
      %c0_6 = arith.constant 0 : index
      %10 = vector.load %arg6[%c0_5, %c0_6] : memref<32x32xbf16, #tpu.memory_space<vmem>>, vector<32x32xbf16>
      %cst = arith.constant dense<0.000000e+00> : vector<16x32xf32>
      %11 = tpu.matmul %9, %10, %cst {dimension_numbers = #tpu.dot_dimension_numbers<[1], [0], [0], [1], [0, 0, 1, 1], [], []>} : vector<16x32xbf16>, vector<32x32xbf16>, vector<16x32xf32> -> vector<16x32xf32>
      %c0_7 = arith.constant 0 : index
      %c0_8 = arith.constant 0 : index
      %12 = vector.load %arg7[%c0_7, %c0_8] : memref<1x32xf32, #tpu.memory_space<vmem>>, vector<1x32xf32>
      %13 = vector.broadcast %12 : vector<1x32xf32> to vector<16x32xf32>
      %14 = arith.addf %11, %13 : vector<16x32xf32>
      %cst_9 = arith.constant 0.000000e+00 : f32
      %15 = vector.broadcast %cst_9 : f32 to vector<16x32xf32>
      %16 = arith.maximumf %14, %15 : vector<16x32xf32>
      %c0_10 = arith.constant 0 : index
      %c0_11 = arith.constant 0 : index
      %17 = vector.load %arg3[%c0_10, %c0_11] : memref<16x16xf32, #tpu.memory_space<vmem>>, vector<16x16xf32>
      %cst_12 = arith.constant 0.000000e+00 : f32
      %18 = vector.broadcast %cst_12 : f32 to vector<16x16xf32>
      %19 = arith.maximumf %17, %18 : vector<16x16xf32>
      %c0_13 = arith.constant 0 : index
      %c0_14 = arith.constant 0 : index
      %20 = vector.load %arg8[%c0_13, %c0_14] : memref<32x16xf32, #tpu.memory_space<vmem>>, vector<32x16xf32>
      %cst_15 = arith.constant dense<0.000000e+00> : vector<16x16xf32>
      %21 = tpu.matmul %16, %20, %cst_15 {dimension_numbers = #tpu.dot_dimension_numbers<[1], [0], [0], [1], [0, 0, 1, 1], [], []>} : vector<16x32xf32>, vector<32x16xf32>, vector<16x16xf32> -> vector<16x16xf32>
      %c0_16 = arith.constant 0 : index
      %c0_17 = arith.constant 0 : index
      %22 = vector.load %arg9[%c0_16, %c0_17] : memref<16x16xf32, #tpu.memory_space<vmem>>, vector<16x16xf32>
      %cst_18 = arith.constant dense<0.000000e+00> : vector<16x16xf32>
      %23 = tpu.matmul %19, %22, %cst_18 {dimension_numbers = #tpu.dot_dimension_numbers<[1], [0], [0], [1], [0, 0, 1, 1], [], []>} : vector<16x16xf32>, vector<16x16xf32>, vector<16x16xf32> -> vector<16x16xf32>
      %24 = arith.addf %21, %23 : vector<16x16xf32>
      %c0_19 = arith.constant 0 : index
      %c0_20 = arith.constant 0 : index
      %25 = vector.load %arg14[%c0_19, %c0_20] : memref<32x16xf32, #tpu.memory_space<vmem>>, vector<32x16xf32>
      %c0_21 = arith.constant 0 : index
      %c0_22 = arith.constant 0 : index
      %26 = vector.load %arg2[%c0_21, %c0_22] : memref<16x32xbf16, #tpu.memory_space<vmem>>, vector<16x32xbf16>
      %27 = arith.truncf %24 : vector<16x16xf32> to vector<16x16xbf16>
      %cst_23 = arith.constant dense<0.000000e+00> : vector<32x16xf32>
      %28 = tpu.matmul %26, %27, %cst_23 {dimension_numbers = #tpu.dot_dimension_numbers<[0], [0], [1], [1], [0, 1, 1, 1], [], []>} : vector<16x32xbf16>, vector<16x16xbf16>, vector<32x16xf32> -> vector<32x16xf32>
      %29 = arith.addf %25, %28 : vector<32x16xf32>
      %c0_24 = arith.constant 0 : index
      %c0_25 = arith.constant 0 : index
      %30 = vector.load %arg14[%c0_24, %c0_25] : memref<32x16xf32, #tpu.memory_space<vmem>>, vector<32x16xf32>
      tpu.vector_store %arg14[%c0_24, %c0_25], %29 {strides = array<i32>} : memref<32x16xf32, #tpu.memory_space<vmem>>, vector<32x16xf32>,
    } else {
    }
    %c1_i32 = arith.constant 1 : i32
    %3 = arith.cmpi eq, %arg0, %c1_i32 : i32
    %4 = arith.extui %3 : i1 to i32
    %c0_i32_1 = arith.constant 0 : i32
    %5 = arith.cmpi ne, %4, %c0_i32_1 : i32
    scf.if %5 {
      %c0_i32_2 = arith.constant 0 : i32
      %6 = arith.cmpi eq, %arg1, %c0_i32_2 : i32
      %7 = arith.extui %6 : i1 to i32
      %c0_i32_3 = arith.constant 0 : i32
      %8 = arith.cmpi ne, %7, %c0_i32_3 : i32
      scf.if %8 {
        %cst_16 = arith.constant 0.000000e+00 : f32
        %30 = vector.broadcast %cst_16 : f32 to vector<8x8xf32>
        %c0_17 = arith.constant 0 : index
        %c0_18 = arith.constant 0 : index
        %31 = vector.load %arg15[%c0_17, %c0_18] : memref<8x8xf32, #tpu.memory_space<vmem>>, vector<8x8xf32>
        tpu.vector_store %arg15[%c0_17, %c0_18], %30 {strides = array<i32>} : memref<8x8xf32, #tpu.memory_space<vmem>>, vector<8x8xf32>,
      } else {
      }
      %c16_i32 = arith.constant 16 : i32
      %9 = arith.muli %arg1, %c16_i32 : i32
      %10 = tpu.assume_multiple %9, 16 : i32
      %11 = arith.index_cast %10 : i32 to index
      %c0 = arith.constant 0 : index
      %12 = vector.load %arg14[%11, %c0] : memref<32x16xf32, #tpu.memory_space<vmem>>, vector<16x16xf32>
      %c0_4 = arith.constant 0 : index
      %c0_5 = arith.constant 0 : index
      %13 = vector.load %arg10[%c0_4, %c0_5] : memref<1x16xf32, #tpu.memory_space<vmem>>, vector<1x16xf32>
      %14 = vector.broadcast %13 : vector<1x16xf32> to vector<16x16xf32>
      %15 = arith.addf %12, %14 : vector<16x16xf32>
      %16 = vector.extract_strided_slice %15 {offsets = [0, 0], sizes = [16, 8], strides = [1, 1]} : vector<16x16xf32> to vector<16x8xf32>
      %17 = vector.extract_strided_slice %15 {offsets = [0, 8], sizes = [16, 8], strides = [1, 1]} : vector<16x16xf32> to vector<16x8xf32>
      %c0_6 = arith.constant 0 : index
      %c0_7 = arith.constant 0 : index
      %18 = vector.load %arg4[%c0_6, %c0_7] : memref<16x8xf32, #tpu.memory_space<vmem>>, vector<16x8xf32>
      %19 = math.exp %17 : vector<16x8xf32>
      %20 = arith.mulf %18, %19 : vector<16x8xf32>
      %21 = arith.addf %16, %20 : vector<16x8xf32>
      %c0_8 = arith.constant 0 : index
      %c0_9 = arith.constant 0 : index
      %22 = vector.load %arg15[%c0_8, %c0_9] : memref<8x8xf32, #tpu.memory_space<vmem>>, vector<8x8xf32>
      %c0_10 = arith.constant 0 : index
      %c0_11 = arith.constant 0 : index
      %23 = vector.load %arg5[%c0_10, %c0_11] : memref<16x8xf32, #tpu.memory_space<vmem>>, vector<16x8xf32>
      %cst = arith.constant dense<0.000000e+00> : vector<8x8xf32>
      %24 = tpu.matmul %23, %21, %cst {dimension_numbers = #tpu.dot_dimension_numbers<[0], [0], [1], [1], [0, 1, 1, 1], [], []>} : vector<16x8xf32>, vector<16x8xf32>, vector<8x8xf32> -> vector<8x8xf32>
      %25 = arith.addf %22, %24 : vector<8x8xf32>
      %c0_12 = arith.constant 0 : index
      %c0_13 = arith.constant 0 : index
      %26 = vector.load %arg15[%c0_12, %c0_13] : memref<8x8xf32, #tpu.memory_space<vmem>>, vector<8x8xf32>
      tpu.vector_store %arg15[%c0_12, %c0_13], %25 {strides = array<i32>} : memref<8x8xf32, #tpu.memory_space<vmem>>, vector<8x8xf32>,
      %c1_i32_14 = arith.constant 1 : i32
      %27 = arith.cmpi eq, %arg1, %c1_i32_14 : i32
      %28 = arith.extui %27 : i1 to i32
      %c0_i32_15 = arith.constant 0 : i32
      %29 = arith.cmpi ne, %28, %c0_i32_15 : i32
      scf.if %29 {
        %c0_16 = arith.constant 0 : index
        %c0_17 = arith.constant 0 : index
        %30 = vector.load %arg15[%c0_16, %c0_17] : memref<8x8xf32, #tpu.memory_space<vmem>>, vector<8x8xf32>
        %c0_18 = arith.constant 0 : index
        %c0_19 = arith.constant 0 : index
        %31 = vector.load %arg11[%c0_18, %c0_19] : memref<8x4xf32, #tpu.memory_space<vmem>>, vector<8x4xf32>
        %cst_20 = arith.constant dense<0.000000e+00> : vector<8x4xf32>
        %32 = tpu.matmul %30, %31, %cst_20 {dimension_numbers = #tpu.dot_dimension_numbers<[1], [0], [0], [1], [0, 0, 1, 1], [], []>} : vector<8x8xf32>, vector<8x4xf32>, vector<8x4xf32> -> vector<8x4xf32>
        %c0_21 = arith.constant 0 : index
        %c0_22 = arith.constant 0 : index
        %33 = vector.load %arg12[%c0_21, %c0_22] : memref<1x4xf32, #tpu.memory_space<vmem>>, vector<1x4xf32>
        %34 = vector.broadcast %33 : vector<1x4xf32> to vector<8x4xf32>
        %35 = arith.addf %32, %34 : vector<8x4xf32>
        %cst_23 = arith.constant dense<0xFF800000> : vector<8xf32>
        %36 = vector.multi_reduction <maximumf>, %35, %cst_23 [1] : vector<8x4xf32> to vector<8xf32>
        %37 = vector.shape_cast %36 : vector<8xf32> to vector<8x1xf32>
        %38 = vector.broadcast %37 : vector<8x1xf32> to vector<8x4xf32>
        %39 = arith.subf %35, %38 : vector<8x4xf32>
        %40 = math.exp %39 : vector<8x4xf32>
        %cst_24 = arith.constant dense<0.000000e+00> : vector<8xf32>
        %41 = vector.multi_reduction <add>, %40, %cst_24 [1] : vector<8x4xf32> to vector<8xf32>
        %42 = vector.shape_cast %41 : vector<8xf32> to vector<8x1xf32>
        %43 = math.log %42 : vector<8x1xf32>
        %44 = arith.addf %37, %43 : vector<8x1xf32>
        %45 = vector.broadcast %44 : vector<8x1xf32> to vector<8x4xf32>
        %46 = arith.subf %35, %45 : vector<8x4xf32>
        %c0_25 = arith.constant 0 : index
        %c0_26 = arith.constant 0 : index
        %47 = vector.load %arg13[%c0_25, %c0_26] : memref<8x4xf32, #tpu.memory_space<vmem>>, vector<8x4xf32>
        tpu.vector_store %arg13[%c0_25, %c0_26], %46 {strides = array<i32>} : memref<8x4xf32, #tpu.memory_space<vmem>>, vector<8x4xf32>,
      } else {
      }
    } else {
    }
    return
  }
  func.func @transform_0(%arg0: i32, %arg1: i32) -> (i32, i32) {
    %c0_i32 = arith.constant 0 : i32
    %0 = arith.cmpi eq, %arg0, %c0_i32 : i32
    %c1_i32 = arith.constant 1 : i32
    %1 = arith.select %0, %arg1, %c1_i32 : i32
    %c0_i32_0 = arith.constant 0 : i32
    %c0_i32_1 = arith.constant 0 : i32
    return %1, %c0_i32_0 : i32, i32
  }
  func.func @transform_1(%arg0: i32, %arg1: i32) -> (i32, i32) {
    %c0_i32 = arith.constant 0 : i32
    %0 = arith.cmpi eq, %arg0, %c0_i32 : i32
    %c1_i32 = arith.constant 1 : i32
    %1 = arith.select %0, %arg1, %c1_i32 : i32
    %c0_i32_0 = arith.constant 0 : i32
    %c0_i32_1 = arith.constant 0 : i32
    return %1, %c0_i32_0 : i32, i32
  }
  func.func @transform_2(%arg0: i32, %arg1: i32) -> (i32, i32) {
    %c0_i32 = arith.constant 0 : i32
    %0 = arith.cmpi eq, %arg0, %c0_i32 : i32
    %c0_i32_0 = arith.constant 0 : i32
    %1 = arith.select %0, %c0_i32_0, %arg1 : i32
    %c0_i32_1 = arith.constant 0 : i32
    %c0_i32_2 = arith.constant 0 : i32
    return %1, %c0_i32_1 : i32, i32
  }
  func.func @transform_3(%arg0: i32, %arg1: i32) -> (i32, i32) {
    %c0_i32 = arith.constant 0 : i32
    %0 = arith.cmpi eq, %arg0, %c0_i32 : i32
    %c0_i32_0 = arith.constant 0 : i32
    %1 = arith.select %0, %c0_i32_0, %arg1 : i32
    %c0_i32_1 = arith.constant 0 : i32
    %c0_i32_2 = arith.constant 0 : i32
    return %1, %c0_i32_1 : i32, i32
  }
  func.func @transform_4(%arg0: i32, %arg1: i32) -> (i32, i32) {
    %c0_i32 = arith.constant 0 : i32
    %c0_i32_0 = arith.constant 0 : i32
    %c0_i32_1 = arith.constant 0 : i32
    return %c0_i32, %c0_i32_0 : i32, i32
  }
  func.func @transform_5(%arg0: i32, %arg1: i32) -> (i32, i32) {
    %c0_i32 = arith.constant 0 : i32
    %c0_i32_0 = arith.constant 0 : i32
    %c0_i32_1 = arith.constant 0 : i32
    return %c0_i32, %c0_i32_0 : i32, i32
  }
  func.func @transform_6(%arg0: i32, %arg1: i32) -> (i32, i32) {
    %c0_i32 = arith.constant 0 : i32
    %c0_i32_0 = arith.constant 0 : i32
    %c0_i32_1 = arith.constant 0 : i32
    return %c0_i32, %c0_i32_0 : i32, i32
  }
  func.func @transform_7(%arg0: i32, %arg1: i32) -> (i32, i32) {
    %c0_i32 = arith.constant 0 : i32
    %c0_i32_0 = arith.constant 0 : i32
    %c0_i32_1 = arith.constant 0 : i32
    return %c0_i32, %c0_i32_0 : i32, i32
  }
  func.func @transform_8(%arg0: i32, %arg1: i32) -> (i32, i32) {
    %c0_i32 = arith.constant 0 : i32
    %c0_i32_0 = arith.constant 0 : i32
    %c0_i32_1 = arith.constant 0 : i32
    return %c0_i32, %c0_i32_0 : i32, i32
  }
  func.func @transform_9(%arg0: i32, %arg1: i32) -> (i32, i32) {
    %c0_i32 = arith.constant 0 : i32
    %c0_i32_0 = arith.constant 0 : i32
    %c0_i32_1 = arith.constant 0 : i32
    return %c0_i32, %c0_i32_0 : i32, i32
  }
  func.func @transform_10(%arg0: i32, %arg1: i32) -> (i32, i32) {
    %c0_i32 = arith.constant 0 : i32
    %c0_i32_0 = arith.constant 0 : i32
    %c0_i32_1 = arith.constant 0 : i32
    return %c0_i32, %c0_i32_0 : i32, i32
  }
  func.func @transform_11(%arg0: i32, %arg1: i32) -> (i32, i32) {
    %c0_i32 = arith.constant 0 : i32
    %c0_i32_0 = arith.constant 0 : i32
    %c0_i32_1 = arith.constant 0 : i32
    return %c0_i32, %c0_i32_0 : i32, i32
  }
}

</mosaic_0001>

<llo_original>
// kernel: tpu_custom_call.1
$region0: #{tpu_custom_call.1}
  #allocation0 [shape = 'u32[]', space=smem, size = 0x4, offset = 0x4, fixed_abs, tag = 'smem constant byte address 0x4 - core index']
  #allocation1 [shape = 'u32[72,128]{1,0:T(1,128)}', space=vmem, size = 0x9000, scoped, tag = 'internal scratch']
  #allocation2 [shape = 'f32[32,16]{1,0:T(8,128)}', space=vmem, size = 0x4000, scoped, tag = 'scratch operand']
  #allocation3 [shape = 'f32[8,8]{1,0:T(8,128)}', space=vmem, size = 0x1000, scoped, tag = 'scratch operand']
  %s0 = inlined_call_operand.vmem [shape: bf16[32,32], index: 0, kind: input, shape index: {}]
  %s1 = inlined_call_operand.vmem [shape: f32[32,16], index: 1, kind: input, shape index: {}]
  %s2 = inlined_call_operand.vmem [shape: f32[32,8], index: 2, kind: input, shape index: {}]
  %s3 = inlined_call_operand.vmem [shape: f32[32,8], index: 3, kind: input, shape index: {}]
  %s4 = inlined_call_operand.vmem [shape: bf16[32,32], index: 4, kind: input, shape index: {}]
  %s5 = inlined_call_operand.vmem [shape: f32[1,32], index: 5, kind: input, shape index: {}]
  %s6 = inlined_call_operand.vmem [shape: f32[32,16], index: 6, kind: input, shape index: {}]
  %s7 = inlined_call_operand.vmem [shape: f32[16,16], index: 7, kind: input, shape index: {}]
  %s8 = inlined_call_operand.vmem [shape: f32[1,16], index: 8, kind: input, shape index: {}]
  %s9 = inlined_call_operand.vmem [shape: f32[8,4], index: 9, kind: input, shape index: {}]
  %s10 = inlined_call_operand.vmem [shape: f32[1,4], index: 10, kind: input, shape index: {}]
  %s11 = inlined_call_operand.vmem [shape: f32[8,4], index: 11, kind: output, shape index: {}]
  %s12 = sld [smem:[#allocation0]]
  $region97: #{tpu_custom_call.1} parent=0
    _
  %s14 = ssub.s32 1, %s12
  %s15 = scalar_select 0, %s14, %s12
  loop: start=0, step=1, limit=6
  $region2: #{tpu_custom_call.1} parent=0 // loop_pre_header
    _
  $region3: #{tpu_custom_call.1} parent=0 // loop_header
    %s17 = sphi 0, %s21
    %p18 = scmp.ge.s32.totalorder %s17, 6
    %s24 = sphi 0, %s36
    %s25 = sphi 0, %s32
    %s26 = sphi 0, %s24
    %s27 = sphi 0, %s25
    %s28 = sphi 0, %s26
    %s29 = sphi 0, %s27
    %s43 = sphi 0, %s45
    %s46 = sphi 0, %s43
    %s47 = sphi 0, %s46
    %s63 = sphi 0, %s47
    %s73 = sphi 0, %s75
    %s76 = sphi 0, %s73
    %s77 = sphi 0, %s76
    %s93 = sphi 0, %s77
    %s103 = sphi 0, %s105
    %s106 = sphi 0, %s103
    %s107 = sphi 0, %s106
    %s123 = sphi 0, %s107
    %s133 = sphi 0, %s135
    %s136 = sphi 0, %s133
    %s137 = sphi 0, %s136
    %s153 = sphi 0, %s137
    %s157 = sphi 0, %s157
    %s159 = sphi 0, %s157
    %s160 = sphi 0, %s159
    %s174 = sphi 0, %s160
    %s178 = sphi 0, %s178
    %s180 = sphi 0, %s178
    %s181 = sphi 0, %s180
    %s195 = sphi 0, %s181
    %s199 = sphi 0, %s199
    %s201 = sphi 0, %s199
    %s202 = sphi 0, %s201
    %s216 = sphi 0, %s202
    %s220 = sphi 0, %s220
    %s222 = sphi 0, %s220
    %s223 = sphi 0, %s222
    %s237 = sphi 0, %s223
    %s241 = sphi 0, %s241
    %s243 = sphi 0, %s241
    %s244 = sphi 0, %s243
    %s258 = sphi 0, %s244
    %s262 = sphi 0, %s262
    %s264 = sphi 0, %s262
    %s265 = sphi 0, %s264
    %s279 = sphi 0, %s265
    %s283 = sphi 0, %s283
    %s285 = sphi 0, %s283
    %s286 = sphi 0, %s285
    %s300 = sphi 0, %s286
    %s304 = sphi 0, %s304
    %s306 = sphi 0, %s304
    %s307 = sphi 0, %s306
    %s321 = sphi 0, %s307
  $region4: #{tpu_custom_call.1} parent=0 // loop_header_branch
    %20 = sbr.rel (%p18) target = $region8
  $region5: #{tpu_custom_call.1} parent=0 // loop_body
    %s22 = ssub.s32 %s17, 1
    %s23 = ssub.s32 %s17, 2
    %s30 = sadd.s32 1, %s25
    %p31 = scmp.ge.s32.totalorder %s30, 2
    %s32 = scalar_select %p31, 0, %s30
    %s33 = sadd.s32 1, %s24
    %s34 = scalar_select %p31, %s33, %s24
    %p35 = scmp.ge.s32.totalorder %s34, 2
    %s36 = scalar_select %p35, 0, %s34
    %p37 = scmp.eq.s32.totalorder %s24, 0
    %s38 = scalar_select %p37, %s25, 1
    %p39 = scmp.eq.s32.totalorder %s36, 0
    %s40 = scalar_select %p39, %s32, 1
    %s41 = ssub.s32 %s38, %s40
    %p42 = scmp.eq.s32.totalorder %s41, 0
    %s44 = sadd.s32 %s43, 1
    %s45 = scalar_select %p42, %s43, %s44
    %p48 = pneg %p42
    %p49 = scmp.eq.s32.totalorder %s17, 3
    %p50 = por %p48, %p49
    %p51 = scmp.ne.s32.totalorder %s43, %s46
    %p52 = scmp.eq.s32.totalorder %s17, 0
    %p53 = por %p51, %p52
    %p54 = scmp.ne.s32.totalorder %s43, %s46
    %p55 = scmp.eq.s32.totalorder %s22, 3
    %p56 = por %p54, %p55
    %p57 = scmp.ne.s32.totalorder %s46, %s47
    %p58 = scmp.eq.s32.totalorder %s22, 0
    %p59 = por %p57, %p58
    %p60 = scmp.ne.s32.totalorder %s46, %s47
    %p61 = scmp.eq.s32.totalorder %s23, 3
    %p62 = por %p60, %p61
    %p64 = scmp.ne.s32.totalorder %s47, %s63
    %p65 = scmp.eq.s32.totalorder %s23, 0
    %p66 = por %p64, %p65
    %p67 = scmp.eq.s32.totalorder %s24, 0
    %s68 = scalar_select %p67, %s25, 1
    %p69 = scmp.eq.s32.totalorder %s36, 0
    %s70 = scalar_select %p69, %s32, 1
    %s71 = ssub.s32 %s68, %s70
    %p72 = scmp.eq.s32.totalorder %s71, 0
    %s74 = sadd.s32 %s73, 1
    %s75 = scalar_select %p72, %s73, %s74
    %p78 = pneg %p72
    %p79 = scmp.eq.s32.totalorder %s17, 3
    %p80 = por %p78, %p79
    %p81 = scmp.ne.s32.totalorder %s73, %s76
    %p82 = scmp.eq.s32.totalorder %s17, 0
    %p83 = por %p81, %p82
    %p84 = scmp.ne.s32.totalorder %s73, %s76
    %p85 = scmp.eq.s32.totalorder %s22, 3
    %p86 = por %p84, %p85
    %p87 = scmp.ne.s32.totalorder %s76, %s77
    %p88 = scmp.eq.s32.totalorder %s22, 0
    %p89 = por %p87, %p88
    %p90 = scmp.ne.s32.totalorder %s76, %s77
    %p91 = scmp.eq.s32.totalorder %s23, 3
    %p92 = por %p90, %p91
    %p94 = scmp.ne.s32.totalorder %s77, %s93
    %p95 = scmp.eq.s32.totalorder %s23, 0
    %p96 = por %p94, %p95
    %p97 = scmp.eq.s32.totalorder %s24, 0
    %s98 = scalar_select %p97, 0, %s25
    %p99 = scmp.eq.s32.totalorder %s36, 0
    %s100 = scalar_select %p99, 0, %s32
    %s101 = ssub.s32 %s98, %s100
    %p102 = scmp.eq.s32.totalorder %s101, 0
    %s104 = sadd.s32 %s103, 1
    %s105 = scalar_select %p102, %s103, %s104
    %p108 = pneg %p102
    %p109 = scmp.eq.s32.totalorder %s17, 3
    %p110 = por %p108, %p109
    %p111 = scmp.ne.s32.totalorder %s103, %s106
    %p112 = scmp.eq.s32.totalorder %s17, 0
    %p113 = por %p111, %p112
    %p114 = scmp.ne.s32.totalorder %s103, %s106
    %p115 = scmp.eq.s32.totalorder %s22, 3
    %p116 = por %p114, %p115
    %p117 = scmp.ne.s32.totalorder %s106, %s107
    %p118 = scmp.eq.s32.totalorder %s22, 0
    %p119 = por %p117, %p118
    %p120 = scmp.ne.s32.totalorder %s106, %s107
    %p121 = scmp.eq.s32.totalorder %s23, 3
    %p122 = por %p120, %p121
    %p124 = scmp.ne.s32.totalorder %s107, %s123
    %p125 = scmp.eq.s32.totalorder %s23, 0
    %p126 = por %p124, %p125
    %p127 = scmp.eq.s32.totalorder %s24, 0
    %s128 = scalar_select %p127, 0, %s25
    %p129 = scmp.eq.s32.totalorder %s36, 0
    %s130 = scalar_select %p129, 0, %s32
    %s131 = ssub.s32 %s128, %s130
    %p132 = scmp.eq.s32.totalorder %s131, 0
    %s134 = sadd.s32 %s133, 1
    %s135 = scalar_select %p132, %s133, %s134
    %p138 = pneg %p132
    %p139 = scmp.eq.s32.totalorder %s17, 3
    %p140 = por %p138, %p139
    %p141 = scmp.ne.s32.totalorder %s133, %s136
    %p142 = scmp.eq.s32.totalorder %s17, 0
    %p143 = por %p141, %p142
    %p144 = scmp.ne.s32.totalorder %s133, %s136
    %p145 = scmp.eq.s32.totalorder %s22, 3
    %p146 = por %p144, %p145
    %p147 = scmp.ne.s32.totalorder %s136, %s137
    %p148 = scmp.eq.s32.totalorder %s22, 0
    %p149 = por %p147, %p148
    %p150 = scmp.ne.s32.totalorder %s136, %s137
    %p151 = scmp.eq.s32.totalorder %s23, 3
    %p152 = por %p150, %p151
    %p154 = scmp.ne.s32.totalorder %s137, %s153
    %p155 = scmp.eq.s32.totalorder %s23, 0
    %p156 = por %p154, %p155
    %s158 = sadd.s32 %s157, 1
    %p161 = scmp.eq.s32.totalorder %s17, 3
    %p162 = scmp.ne.s32.totalorder %s157, %s159
    %p163 = scmp.eq.s32.totalorder %s17, 0
    %p164 = por %p162, %p163
    %p165 = scmp.ne.s32.totalorder %s157, %s159
    %p166 = scmp.eq.s32.totalorder %s22, 3
    %p167 = por %p165, %p166
    %p168 = scmp.ne.s32.totalorder %s159, %s160
    %p169 = scmp.eq.s32.totalorder %s22, 0
    %p170 = por %p168, %p169
    %p171 = scmp.ne.s32.totalorder %s159, %s160
    %p172 = scmp.eq.s32.totalorder %s23, 3
    %p173 = por %p171, %p172
    %p175 = scmp.ne.s32.totalorder %s160, %s174
    %p176 = scmp.eq.s32.totalorder %s23, 0
    %p177 = por %p175, %p176
    %s179 = sadd.s32 %s178, 1
    %p182 = scmp.eq.s32.totalorder %s17, 3
    %p183 = scmp.ne.s32.totalorder %s178, %s180
    %p184 = scmp.eq.s32.totalorder %s17, 0
    %p185 = por %p183, %p184
    %p186 = scmp.ne.s32.totalorder %s178, %s180
    %p187 = scmp.eq.s32.totalorder %s22, 3
    %p188 = por %p186, %p187
    %p189 = scmp.ne.s32.totalorder %s180, %s181
    %p190 = scmp.eq.s32.totalorder %s22, 0
    %p191 = por %p189, %p190
    %p192 = scmp.ne.s32.totalorder %s180, %s181
    %p193 = scmp.eq.s32.totalorder %s23, 3
    %p194 = por %p192, %p193
    %p196 = scmp.ne.s32.totalorder %s181, %s195
    %p197 = scmp.eq.s32.totalorder %s23, 0
    %p198 = por %p196, %p197
    %s200 = sadd.s32 %s199, 1
    %p203 = scmp.eq.s32.totalorder %s17, 3
    %p204 = scmp.ne.s32.totalorder %s199, %s201
    %p205 = scmp.eq.s32.totalorder %s17, 0
    %p206 = por %p204, %p205
    %p207 = scmp.ne.s32.totalorder %s199, %s201
    %p208 = scmp.eq.s32.totalorder %s22, 3
    %p209 = por %p207, %p208
    %p210 = scmp.ne.s32.totalorder %s201, %s202
    %p211 = scmp.eq.s32.totalorder %s22, 0
    %p212 = por %p210, %p211
    %p213 = scmp.ne.s32.totalorder %s201, %s202
    %p214 = scmp.eq.s32.totalorder %s23, 3
    %p215 = por %p213, %p214
    %p217 = scmp.ne.s32.totalorder %s202, %s216
    %p218 = scmp.eq.s32.totalorder %s23, 0
    %p219 = por %p217, %p218
    %s221 = sadd.s32 %s220, 1
    %p224 = scmp.eq.s32.totalorder %s17, 3
    %p225 = scmp.ne.s32.totalorder %s220, %s222
    %p226 = scmp.eq.s32.totalorder %s17, 0
    %p227 = por %p225, %p226
    %p228 = scmp.ne.s32.totalorder %s220, %s222
    %p229 = scmp.eq.s32.totalorder %s22, 3
    %p230 = por %p228, %p229
    %p231 = scmp.ne.s32.totalorder %s222, %s223
    %p232 = scmp.eq.s32.totalorder %s22, 0
    %p233 = por %p231, %p232
    %p234 = scmp.ne.s32.totalorder %s222, %s223
    %p235 = scmp.eq.s32.totalorder %s23, 3
    %p236 = por %p234, %p235
    %p238 = scmp.ne.s32.totalorder %s223, %s237
    %p239 = scmp.eq.s32.totalorder %s23, 0
    %p240 = por %p238, %p239
    %s242 = sadd.s32 %s241, 1
    %p245 = scmp.eq.s32.totalorder %s17, 3
    %p246 = scmp.ne.s32.totalorder %s241, %s243
    %p247 = scmp.eq.s32.totalorder %s17, 0
    %p248 = por %p246, %p247
    %p249 = scmp.ne.s32.totalorder %s241, %s243
    %p250 = scmp.eq.s32.totalorder %s22, 3
    %p251 = por %p249, %p250
    %p252 = scmp.ne.s32.totalorder %s243, %s244
    %p253 = scmp.eq.s32.totalorder %s22, 0
    %p254 = por %p252, %p253
    %p255 = scmp.ne.s32.totalorder %s243, %s244
    %p256 = scmp.eq.s32.totalorder %s23, 3
    %p257 = por %p255, %p256
    %p259 = scmp.ne.s32.totalorder %s244, %s258
    %p260 = scmp.eq.s32.totalorder %s23, 0
    %p261 = por %p259, %p260
    %s263 = sadd.s32 %s262, 1
    %p266 = scmp.eq.s32.totalorder %s17, 3
    %p267 = scmp.ne.s32.totalorder %s262, %s264
    %p268 = scmp.eq.s32.totalorder %s17, 0
    %p269 = por %p267, %p268
    %p270 = scmp.ne.s32.totalorder %s262, %s264
    %p271 = scmp.eq.s32.totalorder %s22, 3
    %p272 = por %p270, %p271
    %p273 = scmp.ne.s32.totalorder %s264, %s265
    %p274 = scmp.eq.s32.totalorder %s22, 0
    %p275 = por %p273, %p274
    %p276 = scmp.ne.s32.totalorder %s264, %s265
    %p277 = scmp.eq.s32.totalorder %s23, 3
    %p278 = por %p276, %p277
    %p280 = scmp.ne.s32.totalorder %s265, %s279
    %p281 = scmp.eq.s32.totalorder %s23, 0
    %p282 = por %p280, %p281
    %s284 = sadd.s32 %s283, 1
    %p287 = scmp.eq.s32.totalorder %s17, 3
    %p288 = scmp.ne.s32.totalorder %s283, %s285
    %p289 = scmp.eq.s32.totalorder %s17, 0
    %p290 = por %p288, %p289
    %p291 = scmp.ne.s32.totalorder %s283, %s285
    %p292 = scmp.eq.s32.totalorder %s22, 3
    %p293 = por %p291, %p292
    %p294 = scmp.ne.s32.totalorder %s285, %s286
    %p295 = scmp.eq.s32.totalorder %s22, 0
    %p296 = por %p294, %p295
    %p297 = scmp.ne.s32.totalorder %s285, %s286
    %p298 = scmp.eq.s32.totalorder %s23, 3
    %p299 = por %p297, %p298
    %p301 = scmp.ne.s32.totalorder %s286, %s300
    %p302 = scmp.eq.s32.totalorder %s23, 0
    %p303 = por %p301, %p302
    %s305 = sadd.s32 %s304, 1
    %p308 = scmp.eq.s32.totalorder %s17, 3
    %p309 = scmp.ne.s32.totalorder %s304, %s306
    %p310 = scmp.eq.s32.totalorder %s17, 0
    %p311 = por %p309, %p310
    %p312 = scmp.ne.s32.totalorder %s304, %s306
    %p313 = scmp.eq.s32.totalorder %s22, 3
    %p314 = por %p312, %p313
    %p315 = scmp.ne.s32.totalorder %s306, %s307
    %p316 = scmp.eq.s32.totalorder %s22, 0
    %p317 = por %p315, %p316
    %p318 = scmp.ne.s32.totalorder %s306, %s307
    %p319 = scmp.eq.s32.totalorder %s23, 3
    %p320 = por %p318, %p319
    %p322 = scmp.ne.s32.totalorder %s307, %s321
    %p323 = scmp.eq.s32.totalorder %s23, 0
    %p324 = por %p322, %p323
    %p325 = scmp.le.s32.totalorder 1, %s17
    %p326 = scmp.lt.s32.totalorder %s17, 5
    %p327 = pnand %p325, %p326
    %p328 = pneg %p327
    // Predicated region
    $region9: #{tpu_custom_call.1} parent=5 // pred_check
      _
    $region10: #{tpu_custom_call.1} parent=5 // pred_check_branch
      %330 = sbr.rel (%p327) target = $region12
    $region11: #{tpu_custom_call.1} parent=5 // pred_region
      %s331 = ssub.s32 %s17, 1
      // Predicated region
      $region13: #{tpu_custom_call.1} parent=11 // pred_check
        %p332 = pneg %p170
      $region14: #{tpu_custom_call.1} parent=11 // pred_check_branch
        %334 = sbr.rel (%p332) target = $region16
      $region15: #{tpu_custom_call.1} parent=11 // pred_region
        _
      $region16: #{tpu_custom_call.1} parent=11 // pred_fallthru
        _
      // Predicated region
      $region17: #{tpu_custom_call.1} parent=11 // pred_check
        %p335 = pneg %p191
      $region18: #{tpu_custom_call.1} parent=11 // pred_check_branch
        %337 = sbr.rel (%p335) target = $region20
      $region19: #{tpu_custom_call.1} parent=11 // pred_region
        _
      $region20: #{tpu_custom_call.1} parent=11 // pred_fallthru
        _
      // Predicated region
      $region21: #{tpu_custom_call.1} parent=11 // pred_check
        %p338 = pneg %p212
      $region22: #{tpu_custom_call.1} parent=11 // pred_check_branch
        %340 = sbr.rel (%p338) target = $region24
      $region23: #{tpu_custom_call.1} parent=11 // pred_region
        _
      $region24: #{tpu_custom_call.1} parent=11 // pred_fallthru
        _
      // Predicated region
      $region25: #{tpu_custom_call.1} parent=11 // pred_check
        %p341 = pneg %p233
      $region26: #{tpu_custom_call.1} parent=11 // pred_check_branch
        %343 = sbr.rel (%p341) target = $region28
      $region27: #{tpu_custom_call.1} parent=11 // pred_region
        _
      $region28: #{tpu_custom_call.1} parent=11 // pred_fallthru
        _
      // Predicated region
      $region29: #{tpu_custom_call.1} parent=11 // pred_check
        %p344 = pneg %p254
      $region30: #{tpu_custom_call.1} parent=11 // pred_check_branch
        %346 = sbr.rel (%p344) target = $region32
      $region31: #{tpu_custom_call.1} parent=11 // pred_region
        _
      $region32: #{tpu_custom_call.1} parent=11 // pred_fallthru
        _
      // Predicated region
      $region33: #{tpu_custom_call.1} parent=11 // pred_check
        %p347 = pneg %p275
      $region34: #{tpu_custom_call.1} parent=11 // pred_check_branch
        %349 = sbr.rel (%p347) target = $region36
      $region35: #{tpu_custom_call.1} parent=11 // pred_region
        _
      $region36: #{tpu_custom_call.1} parent=11 // pred_fallthru
        _
      // Predicated region
      $region37: #{tpu_custom_call.1} parent=11 // pred_check
        %p350 = pneg %p296
      $region38: #{tpu_custom_call.1} parent=11 // pred_check_branch
        %352 = sbr.rel (%p350) target = $region40
      $region39: #{tpu_custom_call.1} parent=11 // pred_region
        _
      $region40: #{tpu_custom_call.1} parent=11 // pred_fallthru
        _
    $region12: #{tpu_custom_call.1} parent=5 // pred_fallthru
      _
    %p353 = scmp.lt.s32.totalorder %s17, 4
    // Predicated region
    $region41: #{tpu_custom_call.1} parent=5 // pred_check
      %p354 = pneg %p353
    $region42: #{tpu_custom_call.1} parent=5 // pred_check_branch
      %356 = sbr.rel (%p354) target = $region44
    $region43: #{tpu_custom_call.1} parent=5 // pred_region
      // Predicated region
      $region45: #{tpu_custom_call.1} parent=43 // pred_check
        %p357 = pneg %p53
      $region46: #{tpu_custom_call.1} parent=43 // pred_check_branch
        %359 = sbr.rel (%p357) target = $region48
      $region47: #{tpu_custom_call.1} parent=43 // pred_region
        %p360 = scmp.eq.s32.totalorder %s24, 0
        %s361 = scalar_select %p360, %s25, 1
        %s362 = smul.u32 2, %s361
        %p363 = scmp.lt.s32.totalorder %s362, 3
        %s364 = scalar_select %p363, %s362, 3
        %s365 = smul.addr %s364, 4
        %s366 = scalar_lea.vmem %s0, %s365
        %p367 = scmp.eq.s32.totalorder %s24, 0
        %s368 = scalar_select %p367, %s25, 1
        %s369 = smul.u32 2, %s368
      $region48: #{tpu_custom_call.1} parent=43 // pred_fallthru
        _
      // Predicated region
      $region49: #{tpu_custom_call.1} parent=43 // pred_check
        %p370 = pneg %p83
      $region50: #{tpu_custom_call.1} parent=43 // pred_check_branch
        %372 = sbr.rel (%p370) target = $region52
      $region51: #{tpu_custom_call.1} parent=43 // pred_region
        %p373 = scmp.eq.s32.totalorder %s24, 0
        %s374 = scalar_select %p373, %s25, 1
        %s375 = smul.u32 2, %s374
        %p376 = scmp.lt.s32.totalorder %s375, 3
        %s377 = scalar_select %p376, %s375, 3
        %s378 = smul.addr %s377, 8
        %s379 = scalar_lea.vmem %s1, %s378
        %p380 = scmp.eq.s32.totalorder %s24, 0
        %s381 = scalar_select %p380, %s25, 1
        %s382 = smul.u32 2, %s381
      $region52: #{tpu_custom_call.1} parent=43 // pred_fallthru
        _
      // Predicated region
      $region53: #{tpu_custom_call.1} parent=43 // pred_check
        %p383 = pneg %p113
      $region54: #{tpu_custom_call.1} parent=43 // pred_check_branch
        %385 = sbr.rel (%p383) target = $region56
      $region55: #{tpu_custom_call.1} parent=43 // pred_region
        %p386 = scmp.eq.s32.totalorder %s24, 0
        %s387 = scalar_select %p386, 0, %s25
        %s388 = smul.u32 2, %s387
        %p389 = scmp.lt.s32.totalorder %s388, 3
        %s390 = scalar_select %p389, %s388, 3
        %s391 = smul.addr %s390, 8
        %s392 = scalar_lea.vmem %s2, %s391
        %p393 = scmp.eq.s32.totalorder %s24, 0
        %s394 = scalar_select %p393, 0, %s25
        %s395 = smul.u32 2, %s394
      $region56: #{tpu_custom_call.1} parent=43 // pred_fallthru
        _
      // Predicated region
      $region57: #{tpu_custom_call.1} parent=43 // pred_check
        %p396 = pneg %p143
      $region58: #{tpu_custom_call.1} parent=43 // pred_check_branch
        %398 = sbr.rel (%p396) target = $region60
      $region59: #{tpu_custom_call.1} parent=43 // pred_region
        %p399 = scmp.eq.s32.totalorder %s24, 0
        %s400 = scalar_select %p399, 0, %s25
        %s401 = smul.u32 2, %s400
        %p402 = scmp.lt.s32.totalorder %s401, 3
        %s403 = scalar_select %p402, %s401, 3
        %s404 = smul.addr %s403, 8
        %s405 = scalar_lea.vmem %s3, %s404
        %p406 = scmp.eq.s32.totalorder %s24, 0
        %s407 = scalar_select %p406, 0, %s25
        %s408 = smul.u32 2, %s407
      $region60: #{tpu_custom_call.1} parent=43 // pred_fallthru
        _
    $region44: #{tpu_custom_call.1} parent=5 // pred_fallthru
      _
    %p409 = scmp.le.s32.totalorder 1, %s17
    %p410 = scmp.lt.s32.totalorder %s17, 5
    %p411 = pnand %p409, %p410
    %p412 = pneg %p411
    // Predicated region
    $region61: #{tpu_custom_call.1} parent=5 // pred_check
      _
    $region62: #{tpu_custom_call.1} parent=5 // pred_check_branch
      %414 = sbr.rel (%p411) target = $region64
    $region63: #{tpu_custom_call.1} parent=5 // pred_region
      %s415 = ssub.s32 %s17, 1
      %p416 = scmp.eq.s32.totalorder %s26, 0
      %s417 = scalar_select %p416, %s27, 1
      %s418 = smul.u32 2, %s417
      %p419 = scmp.lt.s32.totalorder %s418, 3
      %s420 = scalar_select %p419, %s418, 3
      %s421 = smul.addr %s420, 4
      %s422 = scalar_lea.vmem %s0, %s421
      %p423 = pneg %p59
      %p424 = pneg %p56
      %p425 = scmp.eq.s32.totalorder %s26, 0
      %s426 = scalar_select %p425, %s27, 1
      %s427 = smul.u32 2, %s426
      %p428 = scmp.lt.s32.totalorder %s427, 3
      %s429 = scalar_select %p428, %s427, 3
      %s430 = smul.addr %s429, 8
      %s431 = scalar_lea.vmem %s1, %s430
      %p432 = pneg %p89
      %p433 = pneg %p86
      %p434 = scmp.eq.s32.totalorder %s26, 0
      %s435 = scalar_select %p434, 0, %s27
      %s436 = smul.u32 2, %s435
      %p437 = scmp.lt.s32.totalorder %s436, 3
      %s438 = scalar_select %p437, %s436, 3
      %s439 = smul.addr %s438, 8
      %s440 = scalar_lea.vmem %s2, %s439
      %p441 = pneg %p119
      %p442 = pneg %p116
      %p443 = scmp.eq.s32.totalorder %s26, 0
      %s444 = scalar_select %p443, 0, %s27
      %s445 = smul.u32 2, %s444
      %p446 = scmp.lt.s32.totalorder %s445, 3
      %s447 = scalar_select %p446, %s445, 3
      %s448 = smul.addr %s447, 8
      %s449 = scalar_lea.vmem %s3, %s448
      %p450 = pneg %p149
      %p451 = pneg %p146
      %p452 = pneg %p170
      %p453 = pneg %p167
      %p454 = pneg %p191
      %p455 = pneg %p188
      %p456 = pneg %p212
      %p457 = pneg %p209
      %p458 = pneg %p233
      %p459 = pneg %p230
      %p460 = pneg %p254
      %p461 = pneg %p251
      %p462 = pneg %p275
      %p463 = pneg %p272
      %p464 = pneg %p296
      %p465 = pneg %p293
      %p466 = pneg %p317
      %p467 = pneg %p314
      %p468 = scmp.eq.s32.totalorder %s26, 0
      %s469 = scalar_select %p468, %s27, 1
      %s470 = smul.u32 2, %s469
      %p471 = scmp.lt.s32.totalorder %s470, 3
      %s472 = scalar_select %p471, %s470, 3
      %s473 = smul.addr %s472, 4
      %s474 = scalar_lea.vmem %s0, %s473
      %p475 = scmp.eq.s32.totalorder %s26, 0
      %s476 = scalar_select %p475, %s27, 1
      %s477 = smul.u32 2, %s476
      %p478 = scmp.eq.s32.totalorder %s26, 0
      %s479 = scalar_select %p478, %s27, 1
      %s480 = smul.u32 2, %s479
      %p481 = scmp.lt.s32.totalorder %s480, 3
      %s482 = scalar_select %p481, %s480, 3
      %s483 = smul.addr %s482, 8
      %s484 = scalar_lea.vmem %s1, %s483
      %p485 = scmp.eq.s32.totalorder %s26, 0
      %s486 = scalar_select %p485, %s27, 1
      %s487 = smul.u32 2, %s486
      %p488 = scmp.eq.s32.totalorder %s26, 0
      %s489 = scalar_select %p488, 0, %s27
      %s490 = smul.u32 2, %s489
      %p491 = scmp.lt.s32.totalorder %s490, 3
      %s492 = scalar_select %p491, %s490, 3
      %s493 = smul.addr %s492, 8
      %s494 = scalar_lea.vmem %s2, %s493
      %p495 = scmp.eq.s32.totalorder %s26, 0
      %s496 = scalar_select %p495, 0, %s27
      %s497 = smul.u32 2, %s496
      %p498 = scmp.eq.s32.totalorder %s26, 0
      %s499 = scalar_select %p498, 0, %s27
      %s500 = smul.u32 2, %s499
      %p501 = scmp.lt.s32.totalorder %s500, 3
      %s502 = scalar_select %p501, %s500, 3
      %s503 = smul.addr %s502, 8
      %s504 = scalar_lea.vmem %s3, %s503
      %p505 = scmp.eq.s32.totalorder %s26, 0
      %s506 = scalar_select %p505, 0, %s27
      %s507 = smul.u32 2, %s506
      %p509 = scmp.eq.s32.totalorder %s26, 0
      // Predicated region
      $region65: #{tpu_custom_call.1} parent=63 // pred_check
        %p510 = pneg %p509
      $region66: #{tpu_custom_call.1} parent=63 // pred_check_branch
        %512 = sbr.rel (%p510) target = $region68
      $region67: #{tpu_custom_call.1} parent=63 // pred_region
        %p513 = scmp.eq.s32.totalorder %s27, 0
        // Predicated region
        $region69: #{tpu_custom_call.1} parent=67 // pred_check
          %p514 = pneg %p513
        $region70: #{tpu_custom_call.1} parent=67 // pred_check_branch
          %516 = sbr.rel (%p514) target = $region72
        $region71: #{tpu_custom_call.1} parent=67 // pred_region
          %vm517 = vcmask 130048
          %518 = vst.msk [vmem:[#allocation2] sm:$0xff] %vm517, 0.0
          %519 = vst.msk [vmem:[#allocation2 + $0x8] sm:$0xff] %vm517, 0.0
          %520 = vst.msk [vmem:[#allocation2 + $0x10] sm:$0xff] %vm517, 0.0
          %521 = vst.msk [vmem:[#allocation2 + $0x18] sm:$0xff] %vm517, 0.0
        $region72: #{tpu_custom_call.1} parent=67 // pred_fallthru
          _
        %v522 = vld [vmem:[%s474] sm:$0xf]
        %v523 = vld [vmem:[%s474 + $0x4] sm:$0xf]
        %v524 = vld [vmem:[%s4] sm:$0xf]
        %v525 = vld [vmem:[%s4 + $0x4] sm:$0xf]
        %v526 = vld [vmem:[%s4 + $0x8] sm:$0xf]
        %v527 = vld [vmem:[%s4 + $0xc] sm:$0xf]
        %v528 = vld [vmem:[%s5] sm:$0x1]
        %v530 = vperm.slane %v528, 0
        %v534 = vunpack.c.l.b16 %v522
        %v535 = vunpack.c.l.b16 %v523
        %v536 = vpack.c.b16 %v535, %v534
        %v541 = vunpack.c.l.b16 %v524
        %v542 = vunpack.c.l.b16 %v525
        %v543 = vunpack.c.l.b16 %v526
        %v544 = vunpack.c.l.b16 %v527
        %v545 = vpack.c.b16 %v542, %v541
        %v546 = vpack.c.b16 %v544, %v543
        %vm549 = vcmask 261120
        %v551 = vsel %vm549, %v536, 0
        %553 = vmatpush.bf16.msra.mxu0 0
        %554 = vmatpush.bf16.msra.mxu0 0
        %555 = vmatpush.bf16.msra.mxu0 0
        %556 = vmatpush.bf16.msra.mxu0 0
        %557 = vmatpush.bf16.msra.mxu0 0
        %558 = vmatpush.bf16.msra.mxu0 0
        %559 = vmatpush.bf16.msra.mxu0 %v546
        %560 = vmatpush.bf16.msra.mxu0 %v545
        %561 = vmatmul.bf16.gmra.mxu0 %v551
        %v562 = vpop.f32.mrf.mxu0
        %v563 = vadd.f32 %v530, %v562
        %v564 = vpop.f32.mrf.mxu0
        %v565 = vadd.f32 %v530, %v564
        %566 = vdwg.mxu0
        %v567 = vmax.f32 %v563, 0.0
        %v568 = vmax.f32 %v565, 0.0
        %v569 = vld [vmem:[%s484] sm:$0xff]
        %v570 = vld [vmem:[%s484 + $0x8] sm:$0xff]
        %v571 = vmax.f32 %v569, 0.0
        %v572 = vmax.f32 %v570, 0.0
        %v573 = vld [vmem:[%s6] sm:$0xff]
        %v574 = vld [vmem:[%s6 + $0x8] sm:$0xff]
        %v575 = vld [vmem:[%s6 + $0x10] sm:$0xff]
        %v576 = vld [vmem:[%s6 + $0x18] sm:$0xff]
        %v577 = vld [vmem:[%s7] sm:$0xff]
        %v578 = vld [vmem:[%s7 + $0x8] sm:$0xff]
        %vm579 = vcmask 130048
        %v581 = vsel %vm579, %v571, 0
        %v584 = vsel %vm579, %v572, 0
        %586 = vmatpush.msra.mxu0 0.0
        %587 = vmatpush.msra.mxu0 0.0
        %588 = vmatpush.msra.mxu0 0.0
        %589 = vmatpush.msra.mxu0 0.0
        %590 = vmatpush.msra.mxu0 0.0
        %591 = vmatpush.msra.mxu0 0.0
        %592 = vmatpush.msra.mxu0 0.0
        %593 = vmatpush.msra.mxu0 0.0
        %594 = vmatpush.msra.mxu0 0.0
        %595 = vmatpush.msra.mxu0 0.0
        %596 = vmatpush.msra.mxu0 0.0
        %597 = vmatpush.msra.mxu0 0.0
        %598 = vmatpush.msra.mxu0 0.0
        %599 = vmatpush.msra.mxu0 0.0
        %600 = vmatpush.msra.mxu0 %v578
        %601 = vmatpush.msra.mxu0 %v577
        %602 = vmatmul.f32.gmra.mxu0 %v581
        %v603 = vpop.f32.mrf.mxu0
        %v604 = vadd.f32 0.0, %v603
        %605 = vmatmul.f32.gmra.mxu0 %v584
        %v606 = vpop.f32.mrf.mxu0
        %v607 = vadd.f32 0.0, %v606
        %608 = vdwg.mxu0
        %v610 = vsel %vm549, %v567, 0
        %v613 = vsel %vm549, %v568, 0
        %615 = vmatpush.msra.mxu0 0.0
        %616 = vmatpush.msra.mxu0 0.0
        %617 = vmatpush.msra.mxu0 0.0
        %618 = vmatpush.msra.mxu0 0.0
        %619 = vmatpush.msra.mxu0 0.0
        %620 = vmatpush.msra.mxu0 0.0
        %621 = vmatpush.msra.mxu0 0.0
        %622 = vmatpush.msra.mxu0 0.0
        %623 = vmatpush.msra.mxu0 0.0
        %624 = vmatpush.msra.mxu0 0.0
        %625 = vmatpush.msra.mxu0 0.0
        %626 = vmatpush.msra.mxu0 0.0
        %627 = vmatpush.msra.mxu0 %v576
        %628 = vmatpush.msra.mxu0 %v575
        %629 = vmatpush.msra.mxu0 %v574
        %630 = vmatpush.msra.mxu0 %v573
        %631 = vmatmul.f32.gmra.mxu0 %v610
        %v632 = vpop.f32.mrf.mxu0
        %v633 = vadd.f32 %v604, %v632
        %634 = vmatmul.f32.gmra.mxu0 %v613
        %v635 = vpop.f32.mrf.mxu0
        %v636 = vadd.f32 %v607, %v635
        %637 = vdwg.mxu0
        %v638 = vld [vmem:[#allocation2] sm:$0xff]
        %v639 = vld [vmem:[#allocation2 + $0x8] sm:$0xff]
        %v640 = vld [vmem:[#allocation2 + $0x10] sm:$0xff]
        %v641 = vld [vmem:[#allocation2 + $0x18] sm:$0xff]
        %v642 = vpack.c.bf16 %v636, %v633
        %644 = vxpose.xlu0.c.b16.start [1/8] %v536, 128
        %645 = vxpose.xlu0.c.b16.cont [2/8] 0, 128
        %646 = vxpose.xlu0.c.b16.cont [3/8] 0, 128
        %647 = vxpose.xlu0.c.b16.cont [4/8] 0, 128
        %648 = vxpose.xlu0.c.b16.cont [5/8] 0, 128
        %649 = vxpose.xlu0.c.b16.cont [6/8] 0, 128
        %650 = vxpose.xlu0.c.b16.cont [7/8] 0, 128
        %651 = vxpose.xlu0.c.b16.end [8/8] 0, 128
        %v652 = vpop.trf.xlu0
        %v653 = vpop.trf.xlu0
        %v654 = vpop.trf.xlu0
        %v655 = vpop.trf.xlu0
        %v656 = vpop.trf.xlu0
        %v657 = vpop.trf.xlu0
        %v658 = vpop.trf.xlu0
        %v659 = vpop.trf.xlu0
        %v661 = vsel %vm579, %v652, 0
        %v664 = vsel %vm579, %v653, 0
        %666 = vmatpush.bf16.msra.mxu0 0
        %667 = vmatpush.bf16.msra.mxu0 0
        %668 = vmatpush.bf16.msra.mxu0 0
        %669 = vmatpush.bf16.msra.mxu0 0
        %670 = vmatpush.bf16.msra.mxu0 0
        %671 = vmatpush.bf16.msra.mxu0 0
        %672 = vmatpush.bf16.msra.mxu0 0
        %673 = vmatpush.bf16.msra.mxu0 %v642
        %674 = vmatmul.bf16.gmra.mxu0 %v661
        %v675 = vpop.f32.mrf.mxu0
        %v676 = vadd.f32 0.0, %v675
        %v677 = vpop.f32.mrf.mxu0
        %v678 = vadd.f32 0.0, %v677
        %679 = vmatmul.bf16.gmra.mxu0 %v664
        %v680 = vpop.f32.mrf.mxu0
        %v681 = vadd.f32 0.0, %v680
        %v682 = vpop.f32.mrf.mxu0
        %v683 = vadd.f32 0.0, %v682
        %684 = vdwg.mxu0
        %v685 = vadd.f32 %v638, %v676
        %v686 = vadd.f32 %v639, %v678
        %v687 = vadd.f32 %v640, %v681
        %v688 = vadd.f32 %v641, %v683
        %689 = vst.msk [vmem:[#allocation2] sm:$0xff] %vm579, %v685
        %690 = vst.msk [vmem:[#allocation2 + $0x8] sm:$0xff] %vm579, %v686
        %691 = vst.msk [vmem:[#allocation2 + $0x10] sm:$0xff] %vm579, %v687
        %692 = vst.msk [vmem:[#allocation2 + $0x18] sm:$0xff] %vm579, %v688
      $region68: #{tpu_custom_call.1} parent=63 // pred_fallthru
        _
      %p693 = scmp.eq.s32.totalorder %s26, 1
      // Predicated region
      $region73: #{tpu_custom_call.1} parent=63 // pred_check
        %p694 = pneg %p693
      $region74: #{tpu_custom_call.1} parent=63 // pred_check_branch
        %696 = sbr.rel (%p694) target = $region76
      $region75: #{tpu_custom_call.1} parent=63 // pred_region
        %p697 = scmp.eq.s32.totalorder %s27, 0
        // Predicated region
        $region77: #{tpu_custom_call.1} parent=75 // pred_check
          %p698 = pneg %p697
        $region78: #{tpu_custom_call.1} parent=75 // pred_check_branch
          %700 = sbr.rel (%p698) target = $region80
        $region79: #{tpu_custom_call.1} parent=75 // pred_region
          %vm701 = vcmask 64512
          %702 = vst.msk [vmem:[#allocation3] sm:$0xff] %vm701, 0.0
        $region80: #{tpu_custom_call.1} parent=75 // pred_fallthru
          _
        %s703 = smul.u32 %s27, 16
        %s704 = scalar_lea.vmem [#allocation2], %s703
        %v705 = vld [vmem:[%s704] sm:$0xff]
        %v706 = vld [vmem:[%s704 + $0x8] sm:$0xff]
        %v707 = vld [vmem:[%s8] sm:$0x1]
        %v709 = vperm.slane %v707, 0
        %v711 = vadd.f32 %v705, %v709
        %v712 = vadd.f32 %v706, %v709
        %v713 = vld [vmem:[%s494] sm:$0xff]
        %v714 = vld [vmem:[%s494 + $0x8] sm:$0xff]
        %v715 = vmul.f32 %v711, 1.442695
        %v716 = vpow.pop %v715
        %v717 = vmul.f32 %v712, 1.442695
        %v718 = vpow.pop %v717
        %721 = vrot.lane.b32.xlu0 %v716, 120
        %v722 = vpop.permute.xlu0 %721
        %723 = vrot.lane.b32.xlu0 %v718, 120
        %v724 = vpop.permute.xlu0 %723
        %v727 = vmul.f32 %v713, %v722
        %v728 = vmul.f32 %v714, %v724
        %v729 = vadd.f32 %v711, %v727
        %v730 = vadd.f32 %v712, %v728
        %v731 = vld [vmem:[#allocation3] sm:$0xff]
        %v732 = vld [vmem:[%s504] sm:$0xff]
        %v733 = vld [vmem:[%s504 + $0x8] sm:$0xff]
        %734 = vxpose.xlu0.b32.start [1/16] %v732, 128
        %735 = vxpose.xlu0.b32.cont [2/16] %v733, 128
        %736 = vxpose.xlu0.b32.cont [3/16] 0.0, 128
        %737 = vxpose.xlu0.b32.cont [4/16] 0.0, 128
        %738 = vxpose.xlu0.b32.cont [5/16] 0.0, 128
        %739 = vxpose.xlu0.b32.cont [6/16] 0.0, 128
        %740 = vxpose.xlu0.b32.cont [7/16] 0.0, 128
        %741 = vxpose.xlu0.b32.cont [8/16] 0.0, 128
        %742 = vxpose.xlu0.b32.cont [9/16] 0.0, 128
        %743 = vxpose.xlu0.b32.cont [10/16] 0.0, 128
        %744 = vxpose.xlu0.b32.cont [11/16] 0.0, 128
        %745 = vxpose.xlu0.b32.cont [12/16] 0.0, 128
        %746 = vxpose.xlu0.b32.cont [13/16] 0.0, 128
        %747 = vxpose.xlu0.b32.cont [14/16] 0.0, 128
        %748 = vxpose.xlu0.b32.cont [15/16] 0.0, 128
        %749 = vxpose.xlu0.b32.end [16/16] 0.0, 128
        %v750 = vpop.trf.xlu0
        %v751 = vpop.trf.xlu0
        %v752 = vpop.trf.xlu0
        %v753 = vpop.trf.xlu0
        %v754 = vpop.trf.xlu0
        %v755 = vpop.trf.xlu0
        %v756 = vpop.trf.xlu0
        %v757 = vpop.trf.xlu0
        %v758 = vpop.trf.xlu0
        %v759 = vpop.trf.xlu0
        %v760 = vpop.trf.xlu0
        %v761 = vpop.trf.xlu0
        %v762 = vpop.trf.xlu0
        %v763 = vpop.trf.xlu0
        %v764 = vpop.trf.xlu0
        %v765 = vpop.trf.xlu0
        %vm766 = vcmask 130048
        %v768 = vsel %vm766, %v750, 0
        %770 = vmatpush.msra.mxu0 0.0
        %771 = vmatpush.msra.mxu0 0.0
        %772 = vmatpush.msra.mxu0 0.0
        %773 = vmatpush.msra.mxu0 0.0
        %774 = vmatpush.msra.mxu0 0.0
        %775 = vmatpush.msra.mxu0 0.0
        %776 = vmatpush.msra.mxu0 0.0
        %777 = vmatpush.msra.mxu0 0.0
        %778 = vmatpush.msra.mxu0 0.0
        %779 = vmatpush.msra.mxu0 0.0
        %780 = vmatpush.msra.mxu0 0.0
        %781 = vmatpush.msra.mxu0 0.0
        %782 = vmatpush.msra.mxu0 0.0
        %783 = vmatpush.msra.mxu0 0.0
        %784 = vmatpush.msra.mxu0 %v730
        %785 = vmatpush.msra.mxu0 %v729
        %786 = vmatmul.f32.gmra.mxu0 %v768
        %v787 = vpop.f32.mrf.mxu0
        %v788 = vadd.f32 0.0, %v787
        %789 = vdwg.mxu0
        %v790 = vadd.f32 %v731, %v788
        %vm791 = vcmask 64512
        %792 = vst.msk [vmem:[#allocation3] sm:$0xff] %vm791, %v790
        %p793 = scmp.eq.s32.totalorder %s27, 1
        // Predicated region
        $region81: #{tpu_custom_call.1} parent=75 // pred_check
          %p794 = pneg %p793
        $region82: #{tpu_custom_call.1} parent=75 // pred_check_branch
          %796 = sbr.rel (%p794) target = $region84
        $region83: #{tpu_custom_call.1} parent=75 // pred_region
          %v797 = vld [vmem:[#allocation3] sm:$0xff]
          %v798 = vld [vmem:[%s9] sm:$0xff]
          %v799 = vld [vmem:[%s10] sm:$0x1]
          %v801 = vperm.slane %v799, 0
          %v804 = vsel %vm791, %v797, 0
          %806 = vmatpush.msra.mxu0 0.0
          %807 = vmatpush.msra.mxu0 0.0
          %808 = vmatpush.msra.mxu0 0.0
          %809 = vmatpush.msra.mxu0 0.0
          %810 = vmatpush.msra.mxu0 0.0
          %811 = vmatpush.msra.mxu0 0.0
          %812 = vmatpush.msra.mxu0 0.0
          %813 = vmatpush.msra.mxu0 0.0
          %814 = vmatpush.msra.mxu0 0.0
          %815 = vmatpush.msra.mxu0 0.0
          %816 = vmatpush.msra.mxu0 0.0
          %817 = vmatpush.msra.mxu0 0.0
          %818 = vmatpush.msra.mxu0 0.0
          %819 = vmatpush.msra.mxu0 0.0
          %820 = vmatpush.msra.mxu0 0.0
          %821 = vmatpush.msra.mxu0 %v798
          %822 = vmatmul.f32.gmra.mxu0 %v804
          %v823 = vpop.f32.mrf.mxu0
          %v824 = vadd.f32 %v801, %v823
          %825 = vdwg.mxu0
          %vm826 = vcmask 31744
          %v827 = vsel %vm826, %v824, -inf
          %828 = vmax.xlane.f32.xlu0 %v827
          %v829 = vpop.xlane.xlu0 %828
          %v830 = vsub.f32 %v824, %v829
          %v831 = vmul.f32 %v830, 1.442695
          %v832 = vpow.pop %v831
          %v833 = vsel %vm826, %v832, 0.0
          %834 = vadd.xlane.f32.xlu0 %v833
          %v835 = vpop.xlane.xlu0 %834
          %v836 = vlog2.pop %v835
          %v837 = vmul.f32 %v836, 0.6931472
          %v838 = vadd.f32 %v829, %v837
          %v839 = vsub.f32 %v824, %v838
          %840 = vst.msk [vmem:[%s11] sm:$0xff] %vm826, %v839
        $region84: #{tpu_custom_call.1} parent=75 // pred_fallthru
          _
      $region76: #{tpu_custom_call.1} parent=63 // pred_fallthru
        _
      // Predicated region
      $region85: #{tpu_custom_call.1} parent=63 // pred_check
        %p841 = pneg %p314
      $region86: #{tpu_custom_call.1} parent=63 // pred_check_branch
        %843 = sbr.rel (%p841) target = $region88
      $region87: #{tpu_custom_call.1} parent=63 // pred_region
        _
      $region88: #{tpu_custom_call.1} parent=63 // pred_fallthru
        _
      // Predicated region
      $region89: #{tpu_custom_call.1} parent=63 // pred_check
        %p844 = pneg %p314
      $region90: #{tpu_custom_call.1} parent=63 // pred_check_branch
        %846 = sbr.rel (%p844) target = $region92
      $region91: #{tpu_custom_call.1} parent=63 // pred_region
        _
      $region92: #{tpu_custom_call.1} parent=63 // pred_fallthru
        _
    $region64: #{tpu_custom_call.1} parent=5 // pred_fallthru
      _
    %p847 = scmp.le.s32.totalorder 2, %s17
    // Predicated region
    $region93: #{tpu_custom_call.1} parent=5 // pred_check
      %p848 = pneg %p847
    $region94: #{tpu_custom_call.1} parent=5 // pred_check_branch
      %850 = sbr.rel (%p848) target = $region96
    $region95: #{tpu_custom_call.1} parent=5 // pred_region
      %s851 = ssub.s32 %s17, 2
    $region96: #{tpu_custom_call.1} parent=5 // pred_fallthru
      _
  $region6: #{tpu_custom_call.1} parent=0 // loop_footer
    %s21 = sadd.s32 1, %s17
  $region7: #{tpu_custom_call.1} parent=0 // loop_footer_branch
    %16 = sbr.rel target = $region3
  $region8: #{tpu_custom_call.1} parent=0 // loop_exit
    _

</llo_original>
